<compile_context>
chip_gen: v6e
topology: v6e:2x2x1
jax: 0.10.0
libtpu: 0.0.40
codegen_flags: <defaults>
</compile_context>

<pallas_src>
import jax
import jax.numpy as jnp
from jax.experimental import pallas as pl
from jax.experimental.pallas import tpu as pltpu

# Model dims (from the PyTorch spec: iris -> 4 features, 8 hidden, 3 classes).
F = 4      # input features
H = 8      # hidden nodes (also the sublane-padded class-row count)
C = 3      # output classes
LANE = 128
NEG_BIG = -1e30  # bias of padded class rows -> exp() == 0 exactly (no inf/nan)

# Column layout of the packed (8, 128) f32 parameter slab (one vreg).
W1_COL = 0    # cols [0, 4)   : W1  (H, F)
W2_COL = 8    # cols [8, 16)  : W2  (H, H)
W3_COL = 16   # cols [16, 24) : W3  (C, H), rows C..H-1 zero
B1_COL = 24   # col 24        : b1  (H,)
B2_COL = 25   # col 25        : b2  (H,)
B3_COL = 26   # col 26        : b3  (C,), rows C..H-1 = NEG_BIG


def _round_up(x, m):
    return (x + m - 1) // m * m


def iris_kernel(p_ref, x_ref, o_ref):
    p = p_ref[...]                      # (8, 128) parameter slab -- one vreg
    x = x_ref[...]                      # (F, TB)  batch on lanes

    def col(c):                         # (H, 1) column of the slab
        return p[:, c:c + 1]

    # Layer 1: relu(W1 @ x + b1) -- K=4 unrolled broadcast-FMAs on the VPU.
    h = col(B1_COL)                     # bias as accumulator init
    for k in range(F):
        h = h + col(W1_COL + k) * x[k:k + 1, :]
    h = jnp.maximum(h, 0.0)             # (H, TB)

    # Layer 2: relu(W2 @ h + b2) -- K=8 unrolled.
    h2 = col(B2_COL)
    for k in range(H):
        h2 = h2 + col(W2_COL + k) * h[k:k + 1, :]
    h2 = jnp.maximum(h2, 0.0)           # (H, TB)

    # Layer 3: logits = W3 @ h2 + b3 (rows C..H-1 are -1e30 via padded bias).
    z = col(B3_COL)
    for k in range(H):
        z = z + col(W3_COL + k) * h2[k:k + 1, :]

    # Softmax over the class (sublane) axis; padded rows contribute exp() == 0.
    m = jnp.max(z, axis=0, keepdims=True)
    e = jnp.exp(z - m)
    s = jnp.sum(e, axis=0, keepdims=True)
    o_ref[...] = e / s                  # exact normalization: rows sum to 1


def pack_params(w1, b1, w2, b2, w3, b3):
    """Pack PyTorch-layout params (w: (out, in), b: (out,)) into one (8,128) slab."""
    slab = jnp.zeros((H, LANE), jnp.float32)
    slab = slab.at[:, W1_COL:W1_COL + F].set(w1.astype(jnp.float32))
    slab = slab.at[:, W2_COL:W2_COL + H].set(w2.astype(jnp.float32))
    slab = slab.at[:C, W3_COL:W3_COL + H].set(w3.astype(jnp.float32))
    slab = slab.at[:, B1_COL].set(b1.astype(jnp.float32))
    slab = slab.at[:, B2_COL].set(b2.astype(jnp.float32))
    b3_pad = jnp.full((H,), NEG_BIG, jnp.float32).at[:C].set(b3.astype(jnp.float32))
    slab = slab.at[:, B3_COL].set(b3_pad)
    return slab


def _choose_batch_tile(B, tile_b):
    """Pick the lane-axis batch tile and padded batch size."""
    b_ceil = _round_up(max(B, 1), LANE)
    tb = _round_up(min(tile_b, b_ceil), LANE)
    # v7x megacore: keep at least 2 grid steps over the "parallel" batch axis
    # whenever there is more than one vreg-column of batch to split.
    if b_ceil > LANE and b_ceil // tb < 2:
        tb = _round_up(pl.cdiv(b_ceil, 2), LANE)
    b_pad = _round_up(b_ceil, tb)
    return tb, b_pad


def iris_forward(x, w1, b1, w2, b2, w3, b3, *, tile_b=8192, packed_output=False):
    """x: (B, F) f32; weights in PyTorch nn.Linear layout.

    packed_output=False (default): returns (B, C) softmax, matching the PyTorch
    module's forward.  packed_output=True: returns the raw lane-dense
    (H, b_pad) kernel output (rows >= C and lanes >= B are padding), skipping
    the epilogue slice+transpose HBM pass for downstream fused consumers.
    """
    B = x.shape[0]
    assert x.shape[1] == F and w1.shape == (H, F) and w2.shape == (H, H) and w3.shape == (C, H)

    slab = pack_params(w1, b1, w2, b2, w3, b3)
    tb, b_pad = _choose_batch_tile(B, tile_b)

    # Single fused pad of the transposed input (no zeros buffer + scatter).
    # Ideally the upstream pipeline emits (F, B) directly and this is a no-op pad.
    x_t = jnp.pad(x.astype(jnp.float32).T, ((0, 0), (0, b_pad - B)))

    out = pl.pallas_call(
        iris_kernel,
        out_shape=jax.ShapeDtypeStruct((H, b_pad), jnp.float32),
        grid=(b_pad // tb,),
        in_specs=[
            pl.BlockSpec((H, LANE), lambda i: (0, 0)),   # param slab, VMEM-resident
            pl.BlockSpec((F, tb), lambda i: (0, i)),     # batch tile of x
        ],
        out_specs=pl.BlockSpec((H, tb), lambda i: (0, i)),
        compiler_params=pltpu.CompilerParams(dimension_semantics=("parallel",)),
    )(slab, x_t)

    if packed_output:
        return out
    return out[:C, :B].T                                 # (B, C)


def init_params(key):
    """PyTorch nn.Linear-style init U(-1/sqrt(fan_in), 1/sqrt(fan_in)), PyTorch layout."""
    ks = jax.random.split(key, 6)

    def linear(kw, kb, fan_in, fan_out):
        bound = 1.0 / jnp.sqrt(fan_in)
        w = jax.random.uniform(kw, (fan_out, fan_in), jnp.float32, -bound, bound)
        b = jax.random.uniform(kb, (fan_out,), jnp.float32, -bound, bound)
        return w, b

    w1, b1 = linear(ks[0], ks[1], F, H)
    w2, b2 = linear(ks[2], ks[3], H, H)
    w3, b3 = linear(ks[4], ks[5], H, C)
    return w1, b1, w2, b2, w3, b3


def _reference(x, w1, b1, w2, b2, w3, b3):
    h = jnp.maximum(x @ w1.T + b1, 0.0)
    h = jnp.maximum(h @ w2.T + b2, 0.0)
    return jax.nn.softmax(h @ w3.T + b3, axis=1)


if __name__ == "__main__":
    key = jax.random.PRNGKey(0)
    k_x, k_x2, k_p = jax.random.split(key, 3)
    params = init_params(k_p)

    # Small batch (single grid step).
    batch = 8
    x = jax.random.normal(k_x, (batch, F), dtype=jnp.float32)
    out = jax.block_until_ready(iris_forward(x, *params))
    ref = _reference(x, *params)
    assert out.shape == (batch, C)
    assert jnp.allclose(out, ref, atol=2e-3), "mismatch vs reference (small batch)"
    assert jnp.allclose(jnp.sum(out, axis=1), 1.0, atol=1e-3), "rows must sum to 1"

    # Larger batch exercising the parallel batch grid axis (>= 2 grid steps).
    batch2 = 384
    x2 = jax.random.normal(k_x2, (batch2, F), dtype=jnp.float32)
    out2 = jax.block_until_ready(iris_forward(x2, *params))
    ref2 = _reference(x2, *params)
    assert out2.shape == (batch2, C)
    assert jnp.allclose(out2, ref2, atol=2e-3), "mismatch vs reference (gridded batch)"
    assert jnp.all(jnp.argmax(out2, axis=1) == jnp.argmax(ref2, axis=1))

    # Packed lane-dense output path (skips the epilogue slice + transpose).
    out3 = jax.block_until_ready(iris_forward(x2, *params, packed_output=True))
    assert out3.shape[0] == H and out3.shape[1] % LANE == 0
    assert jnp.allclose(out3[:C, :batch2].T, ref2, atol=2e-3)

    print("KERNEL_OK")
</pallas_src>

<mosaic_0001>
module attributes {stable_mosaic.version = 11 : i64} {
  func.func @iris_kernel(%arg0: i32, %arg1: memref<8x128xf32, #tpu.memory_space<vmem>>, %arg2: memref<4x128xf32, #tpu.memory_space<vmem>>, %arg3: memref<8x128xf32, #tpu.memory_space<vmem>>) attributes {dimension_semantics = [#tpu.dimension_semantics<parallel>], iteration_bounds = array<i64: 1>, scalar_prefetch = 0 : i64, scratch_operands = 0 : i64, tpu.core_type = #tpu.core_type<tc>, window_params = [{pipeline_mode = #tpu.pipeline_mode<synchronous>, transform_indices = @transform_0, window_bounds = array<i64: 8, 128>}, {transform_indices = @transform_1, window_bounds = array<i64: 4, 128>}, {transform_indices = @transform_2, window_bounds = array<i64: 8, 128>}]} {
    %c0 = arith.constant 0 : index
    %c0_0 = arith.constant 0 : index
    %0 = vector.load %arg1[%c0, %c0_0] : memref<8x128xf32, #tpu.memory_space<vmem>>, vector<8x128xf32>
    %c0_1 = arith.constant 0 : index
    %c0_2 = arith.constant 0 : index
    %1 = vector.load %arg2[%c0_1, %c0_2] : memref<4x128xf32, #tpu.memory_space<vmem>>, vector<4x128xf32>
    %2 = vector.extract_strided_slice %0 {offsets = [0, 24], sizes = [8, 1], strides = [1, 1]} : vector<8x128xf32> to vector<8x1xf32>
    %3 = vector.extract_strided_slice %0 {offsets = [0, 0], sizes = [8, 1], strides = [1, 1]} : vector<8x128xf32> to vector<8x1xf32>
    %4 = vector.extract_strided_slice %1 {offsets = [0, 0], sizes = [1, 128], strides = [1, 1]} : vector<4x128xf32> to vector<1x128xf32>
    %5 = vector.broadcast %3 : vector<8x1xf32> to vector<8x128xf32>
    %6 = vector.broadcast %4 : vector<1x128xf32> to vector<8x128xf32>
    %7 = arith.mulf %5, %6 : vector<8x128xf32>
    %8 = vector.broadcast %2 : vector<8x1xf32> to vector<8x128xf32>
    %9 = arith.addf %8, %7 : vector<8x128xf32>
    %10 = vector.extract_strided_slice %0 {offsets = [0, 1], sizes = [8, 1], strides = [1, 1]} : vector<8x128xf32> to vector<8x1xf32>
    %11 = vector.extract_strided_slice %1 {offsets = [1, 0], sizes = [1, 128], strides = [1, 1]} : vector<4x128xf32> to vector<1x128xf32>
    %12 = vector.broadcast %10 : vector<8x1xf32> to vector<8x128xf32>
    %13 = vector.broadcast %11 : vector<1x128xf32> to vector<8x128xf32>
    %14 = arith.mulf %12, %13 : vector<8x128xf32>
    %15 = arith.addf %9, %14 : vector<8x128xf32>
    %16 = vector.extract_strided_slice %0 {offsets = [0, 2], sizes = [8, 1], strides = [1, 1]} : vector<8x128xf32> to vector<8x1xf32>
    %17 = vector.extract_strided_slice %1 {offsets = [2, 0], sizes = [1, 128], strides = [1, 1]} : vector<4x128xf32> to vector<1x128xf32>
    %18 = vector.broadcast %16 : vector<8x1xf32> to vector<8x128xf32>
    %19 = vector.broadcast %17 : vector<1x128xf32> to vector<8x128xf32>
    %20 = arith.mulf %18, %19 : vector<8x128xf32>
    %21 = arith.addf %15, %20 : vector<8x128xf32>
    %22 = vector.extract_strided_slice %0 {offsets = [0, 3], sizes = [8, 1], strides = [1, 1]} : vector<8x128xf32> to vector<8x1xf32>
    %23 = vector.extract_strided_slice %1 {offsets = [3, 0], sizes = [1, 128], strides = [1, 1]} : vector<4x128xf32> to vector<1x128xf32>
    %24 = vector.broadcast %22 : vector<8x1xf32> to vector<8x128xf32>
    %25 = vector.broadcast %23 : vector<1x128xf32> to vector<8x128xf32>
    %26 = arith.mulf %24, %25 : vector<8x128xf32>
    %27 = arith.addf %21, %26 : vector<8x128xf32>
    %cst = arith.constant 0.000000e+00 : f32
    %28 = vector.broadcast %cst : f32 to vector<8x128xf32>
    %29 = arith.maximumf %27, %28 : vector<8x128xf32>
    %30 = vector.extract_strided_slice %0 {offsets = [0, 25], sizes = [8, 1], strides = [1, 1]} : vector<8x128xf32> to vector<8x1xf32>
    %31 = vector.extract_strided_slice %0 {offsets = [0, 8], sizes = [8, 1], strides = [1, 1]} : vector<8x128xf32> to vector<8x1xf32>
    %32 = vector.extract_strided_slice %29 {offsets = [0, 0], sizes = [1, 128], strides = [1, 1]} : vector<8x128xf32> to vector<1x128xf32>
    %33 = vector.broadcast %31 : vector<8x1xf32> to vector<8x128xf32>
    %34 = vector.broadcast %32 : vector<1x128xf32> to vector<8x128xf32>
    %35 = arith.mulf %33, %34 : vector<8x128xf32>
    %36 = vector.broadcast %30 : vector<8x1xf32> to vector<8x128xf32>
    %37 = arith.addf %36, %35 : vector<8x128xf32>
    %38 = vector.extract_strided_slice %0 {offsets = [0, 9], sizes = [8, 1], strides = [1, 1]} : vector<8x128xf32> to vector<8x1xf32>
    %39 = vector.extract_strided_slice %29 {offsets = [1, 0], sizes = [1, 128], strides = [1, 1]} : vector<8x128xf32> to vector<1x128xf32>
    %40 = vector.broadcast %38 : vector<8x1xf32> to vector<8x128xf32>
    %41 = vector.broadcast %39 : vector<1x128xf32> to vector<8x128xf32>
    %42 = arith.mulf %40, %41 : vector<8x128xf32>
    %43 = arith.addf %37, %42 : vector<8x128xf32>
    %44 = vector.extract_strided_slice %0 {offsets = [0, 10], sizes = [8, 1], strides = [1, 1]} : vector<8x128xf32> to vector<8x1xf32>
    %45 = vector.extract_strided_slice %29 {offsets = [2, 0], sizes = [1, 128], strides = [1, 1]} : vector<8x128xf32> to vector<1x128xf32>
    %46 = vector.broadcast %44 : vector<8x1xf32> to vector<8x128xf32>
    %47 = vector.broadcast %45 : vector<1x128xf32> to vector<8x128xf32>
    %48 = arith.mulf %46, %47 : vector<8x128xf32>
    %49 = arith.addf %43, %48 : vector<8x128xf32>
    %50 = vector.extract_strided_slice %0 {offsets = [0, 11], sizes = [8, 1], strides = [1, 1]} : vector<8x128xf32> to vector<8x1xf32>
    %51 = vector.extract_strided_slice %29 {offsets = [3, 0], sizes = [1, 128], strides = [1, 1]} : vector<8x128xf32> to vector<1x128xf32>
    %52 = vector.broadcast %50 : vector<8x1xf32> to vector<8x128xf32>
    %53 = vector.broadcast %51 : vector<1x128xf32> to vector<8x128xf32>
    %54 = arith.mulf %52, %53 : vector<8x128xf32>
    %55 = arith.addf %49, %54 : vector<8x128xf32>
    %56 = vector.extract_strided_slice %0 {offsets = [0, 12], sizes = [8, 1], strides = [1, 1]} : vector<8x128xf32> to vector<8x1xf32>
    %57 = vector.extract_strided_slice %29 {offsets = [4, 0], sizes = [1, 128], strides = [1, 1]} : vector<8x128xf32> to vector<1x128xf32>
    %58 = vector.broadcast %56 : vector<8x1xf32> to vector<8x128xf32>
    %59 = vector.broadcast %57 : vector<1x128xf32> to vector<8x128xf32>
    %60 = arith.mulf %58, %59 : vector<8x128xf32>
    %61 = arith.addf %55, %60 : vector<8x128xf32>
    %62 = vector.extract_strided_slice %0 {offsets = [0, 13], sizes = [8, 1], strides = [1, 1]} : vector<8x128xf32> to vector<8x1xf32>
    %63 = vector.extract_strided_slice %29 {offsets = [5, 0], sizes = [1, 128], strides = [1, 1]} : vector<8x128xf32> to vector<1x128xf32>
    %64 = vector.broadcast %62 : vector<8x1xf32> to vector<8x128xf32>
    %65 = vector.broadcast %63 : vector<1x128xf32> to vector<8x128xf32>
    %66 = arith.mulf %64, %65 : vector<8x128xf32>
    %67 = arith.addf %61, %66 : vector<8x128xf32>
    %68 = vector.extract_strided_slice %0 {offsets = [0, 14], sizes = [8, 1], strides = [1, 1]} : vector<8x128xf32> to vector<8x1xf32>
    %69 = vector.extract_strided_slice %29 {offsets = [6, 0], sizes = [1, 128], strides = [1, 1]} : vector<8x128xf32> to vector<1x128xf32>
    %70 = vector.broadcast %68 : vector<8x1xf32> to vector<8x128xf32>
    %71 = vector.broadcast %69 : vector<1x128xf32> to vector<8x128xf32>
    %72 = arith.mulf %70, %71 : vector<8x128xf32>
    %73 = arith.addf %67, %72 : vector<8x128xf32>
    %74 = vector.extract_strided_slice %0 {offsets = [0, 15], sizes = [8, 1], strides = [1, 1]} : vector<8x128xf32> to vector<8x1xf32>
    %75 = vector.extract_strided_slice %29 {offsets = [7, 0], sizes = [1, 128], strides = [1, 1]} : vector<8x128xf32> to vector<1x128xf32>
    %76 = vector.broadcast %74 : vector<8x1xf32> to vector<8x128xf32>
    %77 = vector.broadcast %75 : vector<1x128xf32> to vector<8x128xf32>
    %78 = arith.mulf %76, %77 : vector<8x128xf32>
    %79 = arith.addf %73, %78 : vector<8x128xf32>
    %cst_3 = arith.constant 0.000000e+00 : f32
    %80 = vector.broadcast %cst_3 : f32 to vector<8x128xf32>
    %81 = arith.maximumf %79, %80 : vector<8x128xf32>
    %82 = vector.extract_strided_slice %0 {offsets = [0, 26], sizes = [8, 1], strides = [1, 1]} : vector<8x128xf32> to vector<8x1xf32>
    %83 = vector.extract_strided_slice %0 {offsets = [0, 16], sizes = [8, 1], strides = [1, 1]} : vector<8x128xf32> to vector<8x1xf32>
    %84 = vector.extract_strided_slice %81 {offsets = [0, 0], sizes = [1, 128], strides = [1, 1]} : vector<8x128xf32> to vector<1x128xf32>
    %85 = vector.broadcast %83 : vector<8x1xf32> to vector<8x128xf32>
    %86 = vector.broadcast %84 : vector<1x128xf32> to vector<8x128xf32>
    %87 = arith.mulf %85, %86 : vector<8x128xf32>
    %88 = vector.broadcast %82 : vector<8x1xf32> to vector<8x128xf32>
    %89 = arith.addf %88, %87 : vector<8x128xf32>
    %90 = vector.extract_strided_slice %0 {offsets = [0, 17], sizes = [8, 1], strides = [1, 1]} : vector<8x128xf32> to vector<8x1xf32>
    %91 = vector.extract_strided_slice %81 {offsets = [1, 0], sizes = [1, 128], strides = [1, 1]} : vector<8x128xf32> to vector<1x128xf32>
    %92 = vector.broadcast %90 : vector<8x1xf32> to vector<8x128xf32>
    %93 = vector.broadcast %91 : vector<1x128xf32> to vector<8x128xf32>
    %94 = arith.mulf %92, %93 : vector<8x128xf32>
    %95 = arith.addf %89, %94 : vector<8x128xf32>
    %96 = vector.extract_strided_slice %0 {offsets = [0, 18], sizes = [8, 1], strides = [1, 1]} : vector<8x128xf32> to vector<8x1xf32>
    %97 = vector.extract_strided_slice %81 {offsets = [2, 0], sizes = [1, 128], strides = [1, 1]} : vector<8x128xf32> to vector<1x128xf32>
    %98 = vector.broadcast %96 : vector<8x1xf32> to vector<8x128xf32>
    %99 = vector.broadcast %97 : vector<1x128xf32> to vector<8x128xf32>
    %100 = arith.mulf %98, %99 : vector<8x128xf32>
    %101 = arith.addf %95, %100 : vector<8x128xf32>
    %102 = vector.extract_strided_slice %0 {offsets = [0, 19], sizes = [8, 1], strides = [1, 1]} : vector<8x128xf32> to vector<8x1xf32>
    %103 = vector.extract_strided_slice %81 {offsets = [3, 0], sizes = [1, 128], strides = [1, 1]} : vector<8x128xf32> to vector<1x128xf32>
    %104 = vector.broadcast %102 : vector<8x1xf32> to vector<8x128xf32>
    %105 = vector.broadcast %103 : vector<1x128xf32> to vector<8x128xf32>
    %106 = arith.mulf %104, %105 : vector<8x128xf32>
    %107 = arith.addf %101, %106 : vector<8x128xf32>
    %108 = vector.extract_strided_slice %0 {offsets = [0, 20], sizes = [8, 1], strides = [1, 1]} : vector<8x128xf32> to vector<8x1xf32>
    %109 = vector.extract_strided_slice %81 {offsets = [4, 0], sizes = [1, 128], strides = [1, 1]} : vector<8x128xf32> to vector<1x128xf32>
    %110 = vector.broadcast %108 : vector<8x1xf32> to vector<8x128xf32>
    %111 = vector.broadcast %109 : vector<1x128xf32> to vector<8x128xf32>
    %112 = arith.mulf %110, %111 : vector<8x128xf32>
    %113 = arith.addf %107, %112 : vector<8x128xf32>
    %114 = vector.extract_strided_slice %0 {offsets = [0, 21], sizes = [8, 1], strides = [1, 1]} : vector<8x128xf32> to vector<8x1xf32>
    %115 = vector.extract_strided_slice %81 {offsets = [5, 0], sizes = [1, 128], strides = [1, 1]} : vector<8x128xf32> to vector<1x128xf32>
    %116 = vector.broadcast %114 : vector<8x1xf32> to vector<8x128xf32>
    %117 = vector.broadcast %115 : vector<1x128xf32> to vector<8x128xf32>
    %118 = arith.mulf %116, %117 : vector<8x128xf32>
    %119 = arith.addf %113, %118 : vector<8x128xf32>
    %120 = vector.extract_strided_slice %0 {offsets = [0, 22], sizes = [8, 1], strides = [1, 1]} : vector<8x128xf32> to vector<8x1xf32>
    %121 = vector.extract_strided_slice %81 {offsets = [6, 0], sizes = [1, 128], strides = [1, 1]} : vector<8x128xf32> to vector<1x128xf32>
    %122 = vector.broadcast %120 : vector<8x1xf32> to vector<8x128xf32>
    %123 = vector.broadcast %121 : vector<1x128xf32> to vector<8x128xf32>
    %124 = arith.mulf %122, %123 : vector<8x128xf32>
    %125 = arith.addf %119, %124 : vector<8x128xf32>
    %126 = vector.extract_strided_slice %0 {offsets = [0, 23], sizes = [8, 1], strides = [1, 1]} : vector<8x128xf32> to vector<8x1xf32>
    %127 = vector.extract_strided_slice %81 {offsets = [7, 0], sizes = [1, 128], strides = [1, 1]} : vector<8x128xf32> to vector<1x128xf32>
    %128 = vector.broadcast %126 : vector<8x1xf32> to vector<8x128xf32>
    %129 = vector.broadcast %127 : vector<1x128xf32> to vector<8x128xf32>
    %130 = arith.mulf %128, %129 : vector<8x128xf32>
    %131 = arith.addf %125, %130 : vector<8x128xf32>
    %cst_4 = arith.constant dense<0xFF800000> : vector<128xf32>
    %132 = vector.multi_reduction <maximumf>, %131, %cst_4 [0] : vector<8x128xf32> to vector<128xf32>
    %133 = vector.shape_cast %132 : vector<128xf32> to vector<1x128xf32>
    %134 = vector.broadcast %133 : vector<1x128xf32> to vector<8x128xf32>
    %135 = arith.subf %131, %134 : vector<8x128xf32>
    %136 = math.exp %135 : vector<8x128xf32>
    %cst_5 = arith.constant dense<0.000000e+00> : vector<128xf32>
    %137 = vector.multi_reduction <add>, %136, %cst_5 [0] : vector<8x128xf32> to vector<128xf32>
    %138 = vector.shape_cast %137 : vector<128xf32> to vector<1x128xf32>
    %139 = vector.broadcast %138 : vector<1x128xf32> to vector<8x128xf32>
    %140 = arith.divf %136, %139 : vector<8x128xf32>
    %c0_6 = arith.constant 0 : index
    %c0_7 = arith.constant 0 : index
    %141 = vector.load %arg3[%c0_6, %c0_7] : memref<8x128xf32, #tpu.memory_space<vmem>>, vector<8x128xf32>
    tpu.vector_store %arg3[%c0_6, %c0_7], %140 {strides = array<i32>} : memref<8x128xf32, #tpu.memory_space<vmem>>, vector<8x128xf32>,
    return
  }
  func.func @transform_0(%arg0: i32) -> (i32, i32) {
    %c0_i32 = arith.constant 0 : i32
    %c0_i32_0 = arith.constant 0 : i32
    %c0_i32_1 = arith.constant 0 : i32
    return %c0_i32, %c0_i32_0 : i32, i32
  }
  func.func @transform_1(%arg0: i32) -> (i32, i32) {
    %c0_i32 = arith.constant 0 : i32
    %c0_i32_0 = arith.constant 0 : i32
    return %c0_i32, %arg0 : i32, i32
  }
  func.func @transform_2(%arg0: i32) -> (i32, i32) {
    %c0_i32 = arith.constant 0 : i32
    %c0_i32_0 = arith.constant 0 : i32
    return %c0_i32, %arg0 : i32, i32
  }
}

</mosaic_0001>

<llo_original>
// kernel: tpu_custom_call.1
$region0: #{tpu_custom_call.1}
  #allocation0 [shape = 'u32[]', space=smem, size = 0x4, offset = 0x4, fixed_abs, tag = 'smem constant byte address 0x4 - core index']
  #allocation1 [shape = 'u32[144,128]{1,0:T(1,128)}', space=vmem, size = 0x12000, scoped, tag = 'internal scratch']
  %s0 = inlined_call_operand.hbm [shape: f32[8,128], index: 0, kind: input, shape index: {}]
  %s1 = inlined_call_operand.hbm [shape: f32[4,128], index: 1, kind: input, shape index: {}]
  %s2 = inlined_call_operand.hbm [shape: f32[8,128], index: 2, kind: output, shape index: {}]
  %s3 = sld [smem:[#allocation0]]
  $region26: #{tpu_custom_call.1} parent=0
    _
  %s5 = ssub.s32 1, %s3
  %s6 = scalar_select 0, %s5, %s3
  $region1: #{tpu_custom_call.1} parent=0
    #allocation2 [shape = 'u8[4096]{0}', space=vmem, size = 0x1000, scoped, tag = 'input window, operand 0, single buffered']
    #allocation3 [shape = 's32[1]{0}', space=sflag, size = 0x4, scoped, tag = 'scoped memory for tpu_custom_call.1']
    #allocation4 [shape = 's32[1]{0}', space=sflag, size = 0x4, scoped, tag = 'scoped memory for tpu_custom_call.1']
    #allocation5 [shape = 'u8[2048]{0}', space=vmem, size = 0x800, scoped, tag = 'input window, operand 1, single buffered']
    #allocation6 [shape = 's32[1]{0}', space=sflag, size = 0x4, scoped, tag = 'scoped memory for tpu_custom_call.1']
    #allocation7 [shape = 'u8[4096]{0}', space=vmem, size = 0x1000, scoped, tag = 'output window, operand 0, single buffered']
    %7 = vsyncpa [#allocation3], 0
    %8 = vsyncpa [#allocation6], 0
    %9 = vsyncpa [#allocation4], 0
    // Predicated region
    $region2: #{tpu_custom_call.1} parent=1 // pred_check
      _
    $region3: #{tpu_custom_call.1} parent=1 // pred_check_branch
      %11 = sbr.rel (0) target = $region5
    $region4: #{tpu_custom_call.1} parent=1 // pred_region
      %s13 = ssub.s32 128, 128
      %14 = vsyncadd [#allocation3], %s13
      %s16 = sshll.u32 [#allocation2], 4
      %s17 = int_to_ptr.vmem [resolvable:$true] %s16
      %19 = dma.hbm_to_vmem [thread:$0]  %s0, 128, %s17, [#allocation3]
    $region5: #{tpu_custom_call.1} parent=1 // pred_fallthru
      _
    // Predicated region
    $region6: #{tpu_custom_call.1} parent=1 // pred_check
      _
    $region7: #{tpu_custom_call.1} parent=1 // pred_check_branch
      %21 = sbr.rel (0) target = $region9
    $region8: #{tpu_custom_call.1} parent=1 // pred_region
      %s23 = ssub.s32 64, 64
      %24 = vsyncadd [#allocation6], %s23
      %s26 = sshll.u32 [#allocation5], 4
      %s27 = int_to_ptr.vmem [resolvable:$true] %s26
      %29 = dma.hbm_to_vmem [thread:$0]  %s1, 64, %s27, [#allocation6]
    $region9: #{tpu_custom_call.1} parent=1 // pred_fallthru
      _
    // Predicated region
    $region10: #{tpu_custom_call.1} parent=1 // pred_check
      _
    $region11: #{tpu_custom_call.1} parent=1 // pred_check_branch
      %31 = sbr.rel (0) target = $region13
    $region12: #{tpu_custom_call.1} parent=1 // pred_region
      %32 = dma.done [#allocation3], 128
    $region13: #{tpu_custom_call.1} parent=1 // pred_fallthru
      _
    // Predicated region
    $region14: #{tpu_custom_call.1} parent=1 // pred_check
      _
    $region15: #{tpu_custom_call.1} parent=1 // pred_check_branch
      %34 = sbr.rel (0) target = $region17
    $region16: #{tpu_custom_call.1} parent=1 // pred_region
      %35 = dma.done [#allocation6], 64
    $region17: #{tpu_custom_call.1} parent=1 // pred_fallthru
      _
    %v36 = vld [vmem:[#allocation2] sm:$0xff]
    %v37 = vld [vmem:[#allocation5] sm:$0xf]
    %39 = vset.pattern.permute.xlu0 0
    %40 = vperm.xlu0 %39, %v36
    %v41 = vpop.permute.xlu0 %40
    %v43 = vlaneseq
    %v44 = vshrl.u32 %v43, 7
    %v45 = vsub.s32 0, %v44
    %v46 = vrot.slane %v37, %v45
    %v47 = vmul.f32 %v41, %v46
    %48 = vset.pattern.permute.xlu0 24
    %49 = vperm.xlu0 %48, %v36
    %v50 = vpop.permute.xlu0 %49
    %v52 = vadd.f32 %v50, %v47
    %53 = vset.pattern.permute.xlu0 1
    %54 = vperm.xlu0 %53, %v36
    %v55 = vpop.permute.xlu0 %54
    %v57 = vlaneseq
    %v58 = vshrl.u32 %v57, 7
    %v59 = vsub.s32 1, %v58
    %v60 = vrot.slane %v37, %v59
    %v61 = vmul.f32 %v55, %v60
    %v62 = vadd.f32 %v52, %v61
    %63 = vset.pattern.permute.xlu0 2
    %64 = vperm.xlu0 %63, %v36
    %v65 = vpop.permute.xlu0 %64
    %v67 = vlaneseq
    %v68 = vshrl.u32 %v67, 7
    %v69 = vsub.s32 2, %v68
    %v70 = vrot.slane %v37, %v69
    %v71 = vmul.f32 %v65, %v70
    %v72 = vadd.f32 %v62, %v71
    %73 = vset.pattern.permute.xlu0 3
    %74 = vperm.xlu0 %73, %v36
    %v75 = vpop.permute.xlu0 %74
    %v77 = vlaneseq
    %v78 = vshrl.u32 %v77, 7
    %v79 = vsub.s32 3, %v78
    %v80 = vrot.slane %v37, %v79
    %v81 = vmul.f32 %v75, %v80
    %v82 = vadd.f32 %v72, %v81
    %v83 = vmax.f32 %v82, 0.0
    %84 = vset.pattern.permute.xlu0 8
    %85 = vperm.xlu0 %84, %v36
    %v86 = vpop.permute.xlu0 %85
    %v88 = vlaneseq
    %v89 = vshrl.u32 %v88, 7
    %v90 = vsub.s32 0, %v89
    %v91 = vrot.slane %v83, %v90
    %v92 = vmul.f32 %v86, %v91
    %93 = vset.pattern.permute.xlu0 25
    %94 = vperm.xlu0 %93, %v36
    %v95 = vpop.permute.xlu0 %94
    %v97 = vadd.f32 %v95, %v92
    %98 = vset.pattern.permute.xlu0 9
    %99 = vperm.xlu0 %98, %v36
    %v100 = vpop.permute.xlu0 %99
    %v102 = vlaneseq
    %v103 = vshrl.u32 %v102, 7
    %v104 = vsub.s32 1, %v103
    %v105 = vrot.slane %v83, %v104
    %v106 = vmul.f32 %v100, %v105
    %v107 = vadd.f32 %v97, %v106
    %108 = vset.pattern.permute.xlu0 10
    %109 = vperm.xlu0 %108, %v36
    %v110 = vpop.permute.xlu0 %109
    %v112 = vlaneseq
    %v113 = vshrl.u32 %v112, 7
    %v114 = vsub.s32 2, %v113
    %v115 = vrot.slane %v83, %v114
    %v116 = vmul.f32 %v110, %v115
    %v117 = vadd.f32 %v107, %v116
    %118 = vset.pattern.permute.xlu0 11
    %119 = vperm.xlu0 %118, %v36
    %v120 = vpop.permute.xlu0 %119
    %v122 = vlaneseq
    %v123 = vshrl.u32 %v122, 7
    %v124 = vsub.s32 3, %v123
    %v125 = vrot.slane %v83, %v124
    %v126 = vmul.f32 %v120, %v125
    %v127 = vadd.f32 %v117, %v126
    %128 = vset.pattern.permute.xlu0 12
    %129 = vperm.xlu0 %128, %v36
    %v130 = vpop.permute.xlu0 %129
    %v132 = vlaneseq
    %v133 = vshrl.u32 %v132, 7
    %v134 = vsub.s32 4, %v133
    %v135 = vrot.slane %v83, %v134
    %v136 = vmul.f32 %v130, %v135
    %v137 = vadd.f32 %v127, %v136
    %138 = vset.pattern.permute.xlu0 13
    %139 = vperm.xlu0 %138, %v36
    %v140 = vpop.permute.xlu0 %139
    %v142 = vlaneseq
    %v143 = vshrl.u32 %v142, 7
    %v144 = vsub.s32 5, %v143
    %v145 = vrot.slane %v83, %v144
    %v146 = vmul.f32 %v140, %v145
    %v147 = vadd.f32 %v137, %v146
    %148 = vset.pattern.permute.xlu0 14
    %149 = vperm.xlu0 %148, %v36
    %v150 = vpop.permute.xlu0 %149
    %v152 = vlaneseq
    %v153 = vshrl.u32 %v152, 7
    %v154 = vsub.s32 6, %v153
    %v155 = vrot.slane %v83, %v154
    %v156 = vmul.f32 %v150, %v155
    %v157 = vadd.f32 %v147, %v156
    %158 = vset.pattern.permute.xlu0 15
    %159 = vperm.xlu0 %158, %v36
    %v160 = vpop.permute.xlu0 %159
    %v162 = vlaneseq
    %v163 = vshrl.u32 %v162, 7
    %v164 = vsub.s32 7, %v163
    %v165 = vrot.slane %v83, %v164
    %v166 = vmul.f32 %v160, %v165
    %v167 = vadd.f32 %v157, %v166
    %v168 = vmax.f32 %v167, 0.0
    %169 = vset.pattern.permute.xlu0 16
    %170 = vperm.xlu0 %169, %v36
    %v171 = vpop.permute.xlu0 %170
    %v173 = vlaneseq
    %v174 = vshrl.u32 %v173, 7
    %v175 = vsub.s32 0, %v174
    %v176 = vrot.slane %v168, %v175
    %v177 = vmul.f32 %v171, %v176
    %178 = vset.pattern.permute.xlu0 26
    %179 = vperm.xlu0 %178, %v36
    %v180 = vpop.permute.xlu0 %179
    %v182 = vadd.f32 %v180, %v177
    %183 = vset.pattern.permute.xlu0 17
    %184 = vperm.xlu0 %183, %v36
    %v185 = vpop.permute.xlu0 %184
    %v187 = vlaneseq
    %v188 = vshrl.u32 %v187, 7
    %v189 = vsub.s32 1, %v188
    %v190 = vrot.slane %v168, %v189
    %v191 = vmul.f32 %v185, %v190
    %v192 = vadd.f32 %v182, %v191
    %193 = vset.pattern.permute.xlu0 18
    %194 = vperm.xlu0 %193, %v36
    %v195 = vpop.permute.xlu0 %194
    %v197 = vlaneseq
    %v198 = vshrl.u32 %v197, 7
    %v199 = vsub.s32 2, %v198
    %v200 = vrot.slane %v168, %v199
    %v201 = vmul.f32 %v195, %v200
    %v202 = vadd.f32 %v192, %v201
    %203 = vset.pattern.permute.xlu0 19
    %204 = vperm.xlu0 %203, %v36
    %v205 = vpop.permute.xlu0 %204
    %v207 = vlaneseq
    %v208 = vshrl.u32 %v207, 7
    %v209 = vsub.s32 3, %v208
    %v210 = vrot.slane %v168, %v209
    %v211 = vmul.f32 %v205, %v210
    %v212 = vadd.f32 %v202, %v211
    %213 = vset.pattern.permute.xlu0 20
    %214 = vperm.xlu0 %213, %v36
    %v215 = vpop.permute.xlu0 %214
    %v217 = vlaneseq
    %v218 = vshrl.u32 %v217, 7
    %v219 = vsub.s32 4, %v218
    %v220 = vrot.slane %v168, %v219
    %v221 = vmul.f32 %v215, %v220
    %v222 = vadd.f32 %v212, %v221
    %223 = vset.pattern.permute.xlu0 21
    %224 = vperm.xlu0 %223, %v36
    %v225 = vpop.permute.xlu0 %224
    %v227 = vlaneseq
    %v228 = vshrl.u32 %v227, 7
    %v229 = vsub.s32 5, %v228
    %v230 = vrot.slane %v168, %v229
    %v231 = vmul.f32 %v225, %v230
    %v232 = vadd.f32 %v222, %v231
    %233 = vset.pattern.permute.xlu0 22
    %234 = vperm.xlu0 %233, %v36
    %v235 = vpop.permute.xlu0 %234
    %v237 = vlaneseq
    %v238 = vshrl.u32 %v237, 7
    %v239 = vsub.s32 6, %v238
    %v240 = vrot.slane %v168, %v239
    %v241 = vmul.f32 %v235, %v240
    %v242 = vadd.f32 %v232, %v241
    %243 = vset.pattern.permute.xlu0 23
    %244 = vperm.xlu0 %243, %v36
    %v245 = vpop.permute.xlu0 %244
    %v247 = vlaneseq
    %v248 = vshrl.u32 %v247, 7
    %v249 = vsub.s32 7, %v248
    %v250 = vrot.slane %v168, %v249
    %v251 = vmul.f32 %v245, %v250
    %v252 = vadd.f32 %v242, %v251
    %v253 = vrot.slane %v252, 4
    %v254 = vmax.f32 %v252, %v253
    %v255 = vrot.slane %v254, 2
    %v256 = vmax.f32 %v254, %v255
    %v257 = vrot.slane %v256, 1
    %v258 = vmax.f32 %v256, %v257
    %v259 = vsub.f32 %v252, %v258
    %v260 = vmul.f32 %v259, 1.442695
    %v261 = vpow.pop %v260
    %v262 = vrot.slane %v261, 4
    %v263 = vadd.f32 %v261, %v262
    %v264 = vrot.slane %v263, 2
    %v265 = vadd.f32 %v263, %v264
    %v266 = vrot.slane %v265, 1
    %v267 = vadd.f32 %v265, %v266
    %v268 = vrcp.pop %v267
    %v269 = vmul.f32 %v261, %v268
    %270 = vst [vmem:[#allocation7] sm:$0xff] %v269
    // Predicated region
    $region18: #{tpu_custom_call.1} parent=1 // pred_check
      _
    $region19: #{tpu_custom_call.1} parent=1 // pred_check_branch
      %272 = sbr.rel (0) target = $region21
    $region20: #{tpu_custom_call.1} parent=1 // pred_region
      %s274 = ssub.s32 128, 128
      %275 = vsyncadd [#allocation4], %s274
      %s277 = sshll.u32 [#allocation7], 4
      %s278 = int_to_ptr.vmem [resolvable:$true] %s277
      %280 = dma.vmem_to_hbm [thread:$0]  %s278, 128, %s2, [#allocation4]
    $region21: #{tpu_custom_call.1} parent=1 // pred_fallthru
      _
    // Predicated region
    $region22: #{tpu_custom_call.1} parent=1 // pred_check
      _
    $region23: #{tpu_custom_call.1} parent=1 // pred_check_branch
      %282 = sbr.rel (0) target = $region25
    $region24: #{tpu_custom_call.1} parent=1 // pred_region
      %283 = dma.done [#allocation4], 128
    $region25: #{tpu_custom_call.1} parent=1 // pred_fallthru
      _
    %284 = vsyncpa [#allocation3], 1
    %285 = vsyncpa [#allocation6], 1
    %286 = vsyncpa [#allocation4], 1

</llo_original>
